<compile_context>
chip_gen: v7x
topology: tpu7x:2x2x1
jax: 0.10.0
libtpu: 0.0.40
codegen_flags: <defaults>
</compile_context>

<pallas_src>
import functools

import jax
import jax.numpy as jnp
from jax import lax
from jax.experimental import pallas as pl
from jax.experimental.pallas import tpu as pltpu

EPS = 1e-5


def _series2d_kernel(p_ref, w_ref, b_ref, o_ref):
    # p_ref: (1, K, HW)    im2col patches (transposed) for one batch element
    # w_ref: (Cout, K)     conv weight, flattened as (Cout, Cin*kh*kw)
    # b_ref: (Cout, 1)     conv bias (column, broadcasts over lanes)
    # o_ref: (1, Cout, HW) output in channel-major order
    patches_t = p_ref[0]                               # (K, HW)
    w = w_ref[...]                                     # (Cout, K)
    bias = b_ref[...]                                  # (Cout, 1)

    # --- conv as matmul (MXU): y^T = W @ patches^T ---
    y = jnp.dot(w, patches_t, preferred_element_type=jnp.float32) + bias  # (Cout, HW)

    # --- InstanceNorm2d (per channel, over spatial = lanes) + residual ---
    mean1 = jnp.mean(y, axis=-1, keepdims=True)                 # (Cout, 1)
    var1 = jnp.mean((y - mean1) ** 2, axis=-1, keepdims=True)   # (Cout, 1)
    z = (y - mean1) * lax.rsqrt(var1 + EPS) + y                 # (Cout, HW)

    # --- second InstanceNorm2d ---
    mean2 = jnp.mean(z, axis=-1, keepdims=True)
    var2 = jnp.mean((z - mean2) ** 2, axis=-1, keepdims=True)
    zn = (z - mean2) * lax.rsqrt(var2 + EPS)

    # --- ReLU, lane-dense store ---
    o_ref[0] = jnp.maximum(zn, 0.0)


def _im2col_t(x, kh, kw, stride, padding):
    """x: [B, Cin, H, W] -> patches^T [B, Cin*kh*kw, Ho*Wo] (PyTorch weight order)."""
    B, Cin, H, W = x.shape
    xp = jnp.pad(x, ((0, 0), (0, 0), (padding, padding), (padding, padding)))
    Hp, Wp = H + 2 * padding, W + 2 * padding
    Ho = (Hp - kh) // stride + 1
    Wo = (Wp - kw) // stride + 1
    cols = []
    for i in range(kh):
        for j in range(kw):
            cols.append(
                xp[:, :, i : i + (Ho - 1) * stride + 1 : stride,
                        j : j + (Wo - 1) * stride + 1 : stride]
            )  # [B, Cin, Ho, Wo]
    p = jnp.stack(cols, axis=2)                    # [B, Cin, kh*kw, Ho, Wo]
    # K flattened as (Cin, kh, kw) to match weight.reshape(Cout, Cin*kh*kw).
    p = p.reshape(B, Cin * kh * kw, Ho * Wo)       # [B, K, HW] -- HW is lane-dense
    return p, Ho, Wo


@functools.partial(jax.jit, static_argnames=("kernel_size", "stride", "padding"))
def series2d_block(x, weight, bias, *, kernel_size, stride, padding):
    """x: [B, Cin, H, W]; weight: [Cout, Cin, kh, kw]; bias: [Cout] -> [B, Cout, Ho, Wo]."""
    B, Cin, H, W = x.shape
    Cout = weight.shape[0]
    kh = kw = kernel_size

    patches_t, Ho, Wo = _im2col_t(x, kh, kw, stride, padding)   # [B, K, HW]
    HW = Ho * Wo
    K = Cin * kh * kw
    w_flat = weight.reshape(Cout, K)                            # [Cout, K] (no transpose)
    b_col = bias.reshape(Cout, 1)                               # [Cout, 1]

    # VMEM budget: double-buffered input & output blocks + resident weight/bias.
    block_bytes = 4 * (2 * K * HW + 2 * Cout * HW + Cout * K + Cout)
    vmem_limit = min(64 * 1024 * 1024, max(32 * 1024 * 1024, 4 * block_bytes))

    cost = pl.CostEstimate(
        flops=2 * B * K * HW * Cout + 14 * B * Cout * HW,
        transcendentals=2 * B * Cout,
        bytes_accessed=4 * (B * K * HW + Cout * K + Cout + B * Cout * HW),
    )

    out = pl.pallas_call(
        _series2d_kernel,
        out_shape=jax.ShapeDtypeStruct((B, Cout, HW), jnp.float32),
        grid_spec=pltpu.PrefetchScalarGridSpec(
            num_scalar_prefetch=0,
            grid=(B,),
            in_specs=[
                pl.BlockSpec((1, K, HW), lambda b: (b, 0, 0)),
                pl.BlockSpec((Cout, K), lambda b: (0, 0)),
                pl.BlockSpec((Cout, 1), lambda b: (0, 0)),
            ],
            out_specs=pl.BlockSpec((1, Cout, HW), lambda b: (b, 0, 0)),
        ),
        compiler_params=pltpu.CompilerParams(
            dimension_semantics=("parallel",),
            vmem_limit_bytes=vmem_limit,
        ),
        cost_estimate=cost,
    )(patches_t, w_flat, b_col)

    # [B, Cout, HW] -> [B, Cout, Ho, Wo] is a free row-major reshape (no transpose).
    return out.reshape(B, Cout, Ho, Wo)


def _reference(x, weight, bias, *, kernel_size, stride, padding):
    """Pure-JAX reference mirroring the PyTorch forward."""
    y = lax.conv_general_dilated(
        x, weight,
        window_strides=(stride, stride),
        padding=[(padding, padding), (padding, padding)],
        dimension_numbers=("NCHW", "OIHW", "NCHW"),
    ) + bias.reshape(1, -1, 1, 1)

    def inorm(t):
        m = jnp.mean(t, axis=(2, 3), keepdims=True)
        v = jnp.mean((t - m) ** 2, axis=(2, 3), keepdims=True)
        return (t - m) * lax.rsqrt(v + EPS)

    z = inorm(y) + y
    z = inorm(z)
    return jnp.maximum(z, 0.0)


if __name__ == "__main__":
    # Small shapes consistent with the module's conv: Cin=4 -> Cout=8, k=3, s=1, p=1.
    B, Cin, H, W = 2, 4, 16, 16
    Cout, ksize, stride, padding = 8, 3, 1, 1

    key = jax.random.PRNGKey(0)
    kx, kw_key, kb = jax.random.split(key, 3)
    x = jax.random.normal(kx, (B, Cin, H, W), dtype=jnp.float32)
    # Deterministic parameter init (Conv2d-like scale).
    fan_in = Cin * ksize * ksize
    bound = 1.0 / (fan_in ** 0.5)
    weight = jax.random.uniform(kw_key, (Cout, Cin, ksize, ksize),
                                minval=-bound, maxval=bound, dtype=jnp.float32)
    bias = jax.random.uniform(kb, (Cout,), minval=-bound, maxval=bound,
                              dtype=jnp.float32)

    out = series2d_block(x, weight, bias,
                         kernel_size=ksize, stride=stride, padding=padding)
    out = jax.block_until_ready(out)

    ref = _reference(x, weight, bias,
                     kernel_size=ksize, stride=stride, padding=padding)
    ref = jax.block_until_ready(ref)

    assert out.shape == (B, Cout, H, W)
    assert jnp.max(jnp.abs(out - ref)) < 1e-4, "mismatch vs reference"
    print("KERNEL_OK")
</pallas_src>

<mosaic_0001>
module attributes {stable_mosaic.version = 11 : i64} {
  func.func @_series2d_kernel(%arg0: i32, %arg1: memref<1x36x256xf32, #tpu.memory_space<vmem>>, %arg2: memref<8x36xf32, #tpu.memory_space<vmem>>, %arg3: memref<8x1xf32, #tpu.memory_space<vmem>>, %arg4: memref<1x8x256xf32, #tpu.memory_space<vmem>>) attributes {dimension_semantics = [#tpu.dimension_semantics<parallel>], iteration_bounds = array<i64: 2>, scalar_prefetch = 0 : i64, scratch_operands = 0 : i64, tpu.core_type = #tpu.core_type<tc>, window_params = [{transform_indices = @transform_0, window_bounds = array<i64: 1, 36, 256>}, {pipeline_mode = #tpu.pipeline_mode<synchronous>, transform_indices = @transform_1, window_bounds = array<i64: 8, 36>}, {pipeline_mode = #tpu.pipeline_mode<synchronous>, transform_indices = @transform_2, window_bounds = array<i64: 8, 1>}, {transform_indices = @transform_3, window_bounds = array<i64: 1, 8, 256>}]} {
    %c0 = arith.constant 0 : index
    %c0_0 = arith.constant 0 : index
    %c0_1 = arith.constant 0 : index
    %0 = vector.load %arg1[%c0, %c0_0, %c0_1] : memref<1x36x256xf32, #tpu.memory_space<vmem>>, vector<1x36x256xf32>
    %1 = vector.shape_cast %0 : vector<1x36x256xf32> to vector<36x256xf32>
    %c0_2 = arith.constant 0 : index
    %c0_3 = arith.constant 0 : index
    %2 = vector.load %arg2[%c0_2, %c0_3] : memref<8x36xf32, #tpu.memory_space<vmem>>, vector<8x36xf32>
    %c0_4 = arith.constant 0 : index
    %c0_5 = arith.constant 0 : index
    %3 = vector.load %arg3[%c0_4, %c0_5] : memref<8x1xf32, #tpu.memory_space<vmem>>, vector<8x1xf32>
    %cst = arith.constant dense<0.000000e+00> : vector<8x256xf32>
    %4 = tpu.matmul %2, %1, %cst {dimension_numbers = #tpu.dot_dimension_numbers<[1], [0], [0], [1], [0, 0, 1, 1], [], []>} : vector<8x36xf32>, vector<36x256xf32>, vector<8x256xf32> -> vector<8x256xf32>
    %5 = vector.broadcast %3 : vector<8x1xf32> to vector<8x256xf32>
    %6 = arith.addf %4, %5 : vector<8x256xf32>
    %cst_6 = arith.constant dense<0.000000e+00> : vector<8xf32>
    %7 = vector.multi_reduction <add>, %6, %cst_6 [1] : vector<8x256xf32> to vector<8xf32>
    %8 = vector.shape_cast %7 : vector<8xf32> to vector<8x1xf32>
    %cst_7 = arith.constant 2.560000e+02 : f32
    %9 = vector.broadcast %cst_7 : f32 to vector<8x1xf32>
    %10 = arith.divf %8, %9 : vector<8x1xf32>
    %11 = vector.broadcast %10 : vector<8x1xf32> to vector<8x256xf32>
    %12 = arith.subf %6, %11 : vector<8x256xf32>
    %13 = arith.mulf %12, %12 : vector<8x256xf32>
    %cst_8 = arith.constant dense<0.000000e+00> : vector<8xf32>
    %14 = vector.multi_reduction <add>, %13, %cst_8 [1] : vector<8x256xf32> to vector<8xf32>
    %15 = vector.shape_cast %14 : vector<8xf32> to vector<8x1xf32>
    %cst_9 = arith.constant 2.560000e+02 : f32
    %16 = vector.broadcast %cst_9 : f32 to vector<8x1xf32>
    %17 = arith.divf %15, %16 : vector<8x1xf32>
    %18 = vector.broadcast %10 : vector<8x1xf32> to vector<8x256xf32>
    %19 = arith.subf %6, %18 : vector<8x256xf32>
    %cst_10 = arith.constant 9.99999974E-6 : f32
    %20 = vector.broadcast %cst_10 : f32 to vector<8x1xf32>
    %21 = arith.addf %17, %20 : vector<8x1xf32>
    %22 = math.rsqrt %21 : vector<8x1xf32>
    %23 = vector.broadcast %22 : vector<8x1xf32> to vector<8x256xf32>
    %24 = arith.mulf %19, %23 : vector<8x256xf32>
    %25 = arith.addf %24, %6 : vector<8x256xf32>
    %cst_11 = arith.constant dense<0.000000e+00> : vector<8xf32>
    %26 = vector.multi_reduction <add>, %25, %cst_11 [1] : vector<8x256xf32> to vector<8xf32>
    %27 = vector.shape_cast %26 : vector<8xf32> to vector<8x1xf32>
    %cst_12 = arith.constant 2.560000e+02 : f32
    %28 = vector.broadcast %cst_12 : f32 to vector<8x1xf32>
    %29 = arith.divf %27, %28 : vector<8x1xf32>
    %30 = vector.broadcast %29 : vector<8x1xf32> to vector<8x256xf32>
    %31 = arith.subf %25, %30 : vector<8x256xf32>
    %32 = arith.mulf %31, %31 : vector<8x256xf32>
    %cst_13 = arith.constant dense<0.000000e+00> : vector<8xf32>
    %33 = vector.multi_reduction <add>, %32, %cst_13 [1] : vector<8x256xf32> to vector<8xf32>
    %34 = vector.shape_cast %33 : vector<8xf32> to vector<8x1xf32>
    %cst_14 = arith.constant 2.560000e+02 : f32
    %35 = vector.broadcast %cst_14 : f32 to vector<8x1xf32>
    %36 = arith.divf %34, %35 : vector<8x1xf32>
    %37 = vector.broadcast %29 : vector<8x1xf32> to vector<8x256xf32>
    %38 = arith.subf %25, %37 : vector<8x256xf32>
    %cst_15 = arith.constant 9.99999974E-6 : f32
    %39 = vector.broadcast %cst_15 : f32 to vector<8x1xf32>
    %40 = arith.addf %36, %39 : vector<8x1xf32>
    %41 = math.rsqrt %40 : vector<8x1xf32>
    %42 = vector.broadcast %41 : vector<8x1xf32> to vector<8x256xf32>
    %43 = arith.mulf %38, %42 : vector<8x256xf32>
    %cst_16 = arith.constant 0.000000e+00 : f32
    %44 = vector.broadcast %cst_16 : f32 to vector<8x256xf32>
    %45 = arith.maximumf %43, %44 : vector<8x256xf32>
    %c0_17 = arith.constant 0 : index
    %c0_18 = arith.constant 0 : index
    %c0_19 = arith.constant 0 : index
    %46 = vector.load %arg4[%c0_17, %c0_18, %c0_19] : memref<1x8x256xf32, #tpu.memory_space<vmem>>, vector<1x8x256xf32>
    %47 = vector.shape_cast %46 : vector<1x8x256xf32> to vector<8x256xf32>
    %48 = vector.shape_cast %45 : vector<8x256xf32> to vector<1x8x256xf32>
    tpu.vector_store %arg4[%c0_17, %c0_18, %c0_19], %48 {strides = array<i32>} : memref<1x8x256xf32, #tpu.memory_space<vmem>>, vector<1x8x256xf32>,
    return
  }
  func.func @transform_0(%arg0: i32) -> (i32, i32, i32) {
    %c0_i32 = arith.constant 0 : i32
    %c0_i32_0 = arith.constant 0 : i32
    %c0_i32_1 = arith.constant 0 : i32
    return %arg0, %c0_i32, %c0_i32_0 : i32, i32, i32
  }
  func.func @transform_1(%arg0: i32) -> (i32, i32) {
    %c0_i32 = arith.constant 0 : i32
    %c0_i32_0 = arith.constant 0 : i32
    %c0_i32_1 = arith.constant 0 : i32
    return %c0_i32, %c0_i32_0 : i32, i32
  }
  func.func @transform_2(%arg0: i32) -> (i32, i32) {
    %c0_i32 = arith.constant 0 : i32
    %c0_i32_0 = arith.constant 0 : i32
    %c0_i32_1 = arith.constant 0 : i32
    return %c0_i32, %c0_i32_0 : i32, i32
  }
  func.func @transform_3(%arg0: i32) -> (i32, i32, i32) {
    %c0_i32 = arith.constant 0 : i32
    %c0_i32_0 = arith.constant 0 : i32
    %c0_i32_1 = arith.constant 0 : i32
    return %arg0, %c0_i32, %c0_i32_0 : i32, i32, i32
  }
}

</mosaic_0001>

<llo_original>
// kernel: series2d_block.1
$region0: #{series2d_block.1}
  #allocation0 [shape = 'u32[]', space=smem, size = 0x4, offset = 0x4, fixed_abs, tag = 'smem constant byte address 0x4 - core index']
  #allocation1 [shape = 'u32[144,128]{1,0:T(1,128)}', space=vmem, size = 0x12000, scoped, tag = 'internal scratch']
  %s0 = inlined_call_operand.vmem [shape: f32[2,36,256], index: 0, kind: input, shape index: {}]
  %s1 = inlined_call_operand.vmem [shape: f32[8,36], index: 1, kind: input, shape index: {}]
  %s2 = inlined_call_operand.vmem [shape: f32[8,1], index: 2, kind: input, shape index: {}]
  %s3 = inlined_call_operand.vmem [shape: f32[2,8,256], index: 3, kind: output, shape index: {}]
  %s4 = sld [smem:[#allocation0]]
  $region45: #{series2d_block.1} parent=0
    _
  %s6 = ssub.s32 1, %s4
  %s7 = scalar_select 0, %s6, %s4
  loop: start=0, step=1, limit=4
  $region2: #{series2d_block.1} parent=0 // loop_pre_header
    _
  $region3: #{series2d_block.1} parent=0 // loop_header
    %s9 = sphi 0, %s13
    %p10 = scmp.ge.s32.totalorder %s9, 4
    %s19 = sphi 0, %s21
    %s22 = sphi 0, %s19
    %s23 = sphi 0, %s22
    %s39 = sphi 0, %s23
    %s43 = sphi 0, %s43
    %s45 = sphi 0, %s43
    %s46 = sphi 0, %s45
    %s60 = sphi 0, %s46
    %s64 = sphi 0, %s64
    %s66 = sphi 0, %s64
    %s67 = sphi 0, %s66
    %s81 = sphi 0, %s67
    %s87 = sphi 0, %s89
    %s90 = sphi 0, %s87
    %s91 = sphi 0, %s90
    %s107 = sphi 0, %s91
  $region4: #{series2d_block.1} parent=0 // loop_header_branch
    %12 = sbr.rel (%p10) target = $region8
  $region5: #{series2d_block.1} parent=0 // loop_body
    %s14 = ssub.s32 %s9, 1
    %s15 = ssub.s32 %s9, 2
    %s16 = sadd.s32 %s9, 1
    %s17 = ssub.s32 %s9, %s16
    %p18 = scmp.eq.s32.totalorder %s17, 0
    %s20 = sadd.s32 %s19, 1
    %s21 = scalar_select %p18, %s19, %s20
    %p24 = pneg %p18
    %p25 = scmp.eq.s32.totalorder %s9, 1
    %p26 = por %p24, %p25
    %p27 = scmp.ne.s32.totalorder %s19, %s22
    %p28 = scmp.eq.s32.totalorder %s9, 0
    %p29 = por %p27, %p28
    %p30 = scmp.ne.s32.totalorder %s19, %s22
    %p31 = scmp.eq.s32.totalorder %s14, 1
    %p32 = por %p30, %p31
    %p33 = scmp.ne.s32.totalorder %s22, %s23
    %p34 = scmp.eq.s32.totalorder %s14, 0
    %p35 = por %p33, %p34
    %p36 = scmp.ne.s32.totalorder %s22, %s23
    %p37 = scmp.eq.s32.totalorder %s15, 1
    %p38 = por %p36, %p37
    %p40 = scmp.ne.s32.totalorder %s23, %s39
    %p41 = scmp.eq.s32.totalorder %s15, 0
    %p42 = por %p40, %p41
    %s44 = sadd.s32 %s43, 1
    %p47 = scmp.eq.s32.totalorder %s9, 1
    %p48 = scmp.ne.s32.totalorder %s43, %s45
    %p49 = scmp.eq.s32.totalorder %s9, 0
    %p50 = por %p48, %p49
    %p51 = scmp.ne.s32.totalorder %s43, %s45
    %p52 = scmp.eq.s32.totalorder %s14, 1
    %p53 = por %p51, %p52
    %p54 = scmp.ne.s32.totalorder %s45, %s46
    %p55 = scmp.eq.s32.totalorder %s14, 0
    %p56 = por %p54, %p55
    %p57 = scmp.ne.s32.totalorder %s45, %s46
    %p58 = scmp.eq.s32.totalorder %s15, 1
    %p59 = por %p57, %p58
    %p61 = scmp.ne.s32.totalorder %s46, %s60
    %p62 = scmp.eq.s32.totalorder %s15, 0
    %p63 = por %p61, %p62
    %s65 = sadd.s32 %s64, 1
    %p68 = scmp.eq.s32.totalorder %s9, 1
    %p69 = scmp.ne.s32.totalorder %s64, %s66
    %p70 = scmp.eq.s32.totalorder %s9, 0
    %p71 = por %p69, %p70
    %p72 = scmp.ne.s32.totalorder %s64, %s66
    %p73 = scmp.eq.s32.totalorder %s14, 1
    %p74 = por %p72, %p73
    %p75 = scmp.ne.s32.totalorder %s66, %s67
    %p76 = scmp.eq.s32.totalorder %s14, 0
    %p77 = por %p75, %p76
    %p78 = scmp.ne.s32.totalorder %s66, %s67
    %p79 = scmp.eq.s32.totalorder %s15, 1
    %p80 = por %p78, %p79
    %p82 = scmp.ne.s32.totalorder %s67, %s81
    %p83 = scmp.eq.s32.totalorder %s15, 0
    %p84 = por %p82, %p83
    %s85 = ssub.s32 %s9, %s16
    %p86 = scmp.eq.s32.totalorder %s85, 0
    %s88 = sadd.s32 %s87, 1
    %s89 = scalar_select %p86, %s87, %s88
    %p92 = pneg %p86
    %p93 = scmp.eq.s32.totalorder %s9, 1
    %p94 = por %p92, %p93
    %p95 = scmp.ne.s32.totalorder %s87, %s90
    %p96 = scmp.eq.s32.totalorder %s9, 0
    %p97 = por %p95, %p96
    %p98 = scmp.ne.s32.totalorder %s87, %s90
    %p99 = scmp.eq.s32.totalorder %s14, 1
    %p100 = por %p98, %p99
    %p101 = scmp.ne.s32.totalorder %s90, %s91
    %p102 = scmp.eq.s32.totalorder %s14, 0
    %p103 = por %p101, %p102
    %p104 = scmp.ne.s32.totalorder %s90, %s91
    %p105 = scmp.eq.s32.totalorder %s15, 1
    %p106 = por %p104, %p105
    %p108 = scmp.ne.s32.totalorder %s91, %s107
    %p109 = scmp.eq.s32.totalorder %s15, 0
    %p110 = por %p108, %p109
    %p111 = scmp.le.s32.totalorder 1, %s9
    %p112 = scmp.lt.s32.totalorder %s9, 3
    %p113 = pnand %p111, %p112
    %p114 = pneg %p113
    // Predicated region
    $region9: #{series2d_block.1} parent=5 // pred_check
      _
    $region10: #{series2d_block.1} parent=5 // pred_check_branch
      %116 = sbr.rel (%p113) target = $region12
    $region11: #{series2d_block.1} parent=5 // pred_region
      %s117 = ssub.s32 %s9, 1
      // Predicated region
      $region13: #{series2d_block.1} parent=11 // pred_check
        %p118 = pneg %p56
      $region14: #{series2d_block.1} parent=11 // pred_check_branch
        %120 = sbr.rel (%p118) target = $region16
      $region15: #{series2d_block.1} parent=11 // pred_region
        _
      $region16: #{series2d_block.1} parent=11 // pred_fallthru
        _
      // Predicated region
      $region17: #{series2d_block.1} parent=11 // pred_check
        %p121 = pneg %p77
      $region18: #{series2d_block.1} parent=11 // pred_check_branch
        %123 = sbr.rel (%p121) target = $region20
      $region19: #{series2d_block.1} parent=11 // pred_region
        _
      $region20: #{series2d_block.1} parent=11 // pred_fallthru
        _
    $region12: #{series2d_block.1} parent=5 // pred_fallthru
      _
    %p124 = scmp.lt.s32.totalorder %s9, 2
    // Predicated region
    $region21: #{series2d_block.1} parent=5 // pred_check
      %p125 = pneg %p124
    $region22: #{series2d_block.1} parent=5 // pred_check_branch
      %127 = sbr.rel (%p125) target = $region24
    $region23: #{series2d_block.1} parent=5 // pred_region
      // Predicated region
      $region25: #{series2d_block.1} parent=23 // pred_check
        %p128 = pneg %p29
      $region26: #{series2d_block.1} parent=23 // pred_check_branch
        %130 = sbr.rel (%p128) target = $region28
      $region27: #{series2d_block.1} parent=23 // pred_region
        %p131 = scmp.lt.s32.totalorder %s9, 1
        %s132 = scalar_select %p131, %s9, 1
        %s133 = smul.addr %s132, 10
        %s134 = smul.addr %s133, 8
        %s135 = scalar_lea.vmem %s0, %s134
      $region28: #{series2d_block.1} parent=23 // pred_fallthru
        _
    $region24: #{series2d_block.1} parent=5 // pred_fallthru
      _
    %p136 = scmp.le.s32.totalorder 1, %s9
    %p137 = scmp.lt.s32.totalorder %s9, 3
    %p138 = pnand %p136, %p137
    %p139 = pneg %p138
    // Predicated region
    $region29: #{series2d_block.1} parent=5 // pred_check
      _
    $region30: #{series2d_block.1} parent=5 // pred_check_branch
      %141 = sbr.rel (%p138) target = $region32
    $region31: #{series2d_block.1} parent=5 // pred_region
      %s142 = ssub.s32 %s9, 1
      %p143 = scmp.lt.s32.totalorder %s14, 1
      %s144 = scalar_select %p143, %s14, 1
      %s145 = smul.addr %s144, 10
      %s146 = smul.addr %s145, 8
      %s147 = scalar_lea.vmem %s0, %s146
      %p148 = pneg %p35
      %p149 = pneg %p32
      %p150 = pneg %p56
      %p151 = pneg %p53
      %p152 = pneg %p77
      %p153 = pneg %p74
      %p154 = pneg %p103
      %p155 = pneg %p100
      %p156 = scmp.lt.s32.totalorder %s14, 1
      %s157 = scalar_select %p156, %s14, 1
      %s158 = smul.addr %s157, 2
      %s159 = smul.addr %s158, 8
      %s160 = scalar_lea.vmem %s3, %s159
      %p161 = scmp.lt.s32.totalorder %s14, 1
      %s162 = scalar_select %p161, %s14, 1
      %s163 = smul.addr %s162, 10
      %s164 = smul.addr %s163, 8
      %s165 = scalar_lea.vmem %s0, %s164
      %p166 = scmp.lt.s32.totalorder %s14, 1
      %s167 = scalar_select %p166, %s14, 1
      %s168 = smul.addr %s167, 2
      %s169 = smul.addr %s168, 8
      %s170 = scalar_lea.vmem %s3, %s169
      %v171 = vld [vmem:[%s165] sm:$0xff]
      %v172 = vld [vmem:[%s165 + $0x8] sm:$0xff]
      %v173 = vld [vmem:[%s165 + $0x10] sm:$0xff]
      %v174 = vld [vmem:[%s165 + $0x18] sm:$0xff]
      %v175 = vld [vmem:[%s165 + $0x20] sm:$0xff]
      %v176 = vld [vmem:[%s165 + $0x28] sm:$0xff]
      %v177 = vld [vmem:[%s165 + $0x30] sm:$0xff]
      %v178 = vld [vmem:[%s165 + $0x38] sm:$0xff]
      %v179 = vld [vmem:[%s165 + $0x40] sm:$0xf]
      %v180 = vld [vmem:[%s165 + $0x48] sm:$0xf]
      %v181 = vld [vmem:[%s1] sm:$0xff]
      %v182 = vld [vmem:[%s2] sm:$0xff]
      %184 = vset.pattern.permute.xlu0 0
      %185 = vperm.xlu0 %184, %v182
      %v186 = vpop.permute.xlu0 %185
      %vm188 = vcmask 293888
      %v190 = vsel %vm188, %v181, 0
      %vm192 = vcmask 1043456
      %v194 = vsel %vm192, %v179, 0
      %v197 = vsel %vm192, %v180, 0
      %199 = vmatprep.subr.mxu0 %v172
      %200 = vmatpush1.msra.mxu0 %v171
      %201 = vmatprep.subr.mxu0 %v174
      %202 = vmatpush1.msra.mxu0 %v173
      %203 = vmatprep.subr.mxu0 %v176
      %204 = vmatpush1.msra.mxu0 %v175
      %205 = vmatprep.subr.mxu0 %v178
      %206 = vmatpush1.msra.mxu0 %v177
      %207 = vmatprep.subr.mxu0 %v197
      %208 = vmatpush1.msra.mxu0 %v194
      %209 = vmatprep.subr.mxu0 0.0
      %210 = vmatpush1.msra.mxu0 0.0
      %211 = vmatprep.subr.mxu0 0.0
      %212 = vmatpush1.msra.mxu0 0.0
      %213 = vmatprep.subr.mxu0 0.0
      %214 = vmatpush1.msra.mxu0 0.0
      %215 = vmatprep.subr.mxu0 0.0
      %216 = vmatpush1.msra.mxu0 0.0
      %217 = vmatprep.subr.mxu0 0.0
      %218 = vmatpush1.msra.mxu0 0.0
      %219 = vmatprep.subr.mxu0 0.0
      %220 = vmatpush1.msra.mxu0 0.0
      %221 = vmatprep.subr.mxu0 0.0
      %222 = vmatpush1.msra.mxu0 0.0
      %223 = vmatprep.subr.mxu0 0.0
      %224 = vmatpush1.msra.mxu0 0.0
      %225 = vmatprep.subr.mxu0 0.0
      %226 = vmatpush1.msra.mxu0 0.0
      %227 = vmatprep.subr.mxu0 0.0
      %228 = vmatpush1.msra.mxu0 0.0
      %229 = vmatprep.subr.mxu0 0.0
      %230 = vmatpush1.msra.mxu0 0.0
      %231 = vmatprep.subr.mxu0 0.0
      %232 = vmatpush1.msra.mxu0 0.0
      %233 = vmatprep.subr.mxu0 0.0
      %234 = vmatpush1.msra.mxu0 0.0
      %235 = vmatprep.subr.mxu0 0.0
      %236 = vmatpush1.msra.mxu0 0.0
      %237 = vmatprep.subr.mxu0 0.0
      %238 = vmatpush1.msra.mxu0 0.0
      %239 = vmatprep.subr.mxu0 0.0
      %240 = vmatpush1.msra.mxu0 0.0
      %241 = vmatprep.subr.mxu0 0.0
      %242 = vmatpush1.msra.mxu0 0.0
      %243 = vmatprep.subr.mxu0 0.0
      %244 = vmatpush1.msra.mxu0 0.0
      %245 = vmatprep.subr.mxu0 0.0
      %246 = vmatpush1.msra.mxu0 0.0
      %247 = vmatprep.subr.mxu0 0.0
      %248 = vmatpush1.msra.mxu0 0.0
      %249 = vmatprep.subr.mxu0 0.0
      %250 = vmatpush1.msra.mxu0 0.0
      %251 = vmatprep.subr.mxu0 0.0
      %252 = vmatpush1.msra.mxu0 0.0
      %253 = vmatprep.subr.mxu0 0.0
      %254 = vmatpush1.msra.mxu0 0.0
      %255 = vmatprep.subr.mxu0 0.0
      %256 = vmatpush1.msra.mxu0 0.0
      %257 = vmatprep.subr.mxu0 0.0
      %258 = vmatpush1.msra.mxu0 0.0
      %259 = vmatprep.subr.mxu0 0.0
      %260 = vmatpush1.msra.mxu0 0.0
      %261 = vmatprep.subr.mxu0 0.0
      %262 = vmatpush1.msra.mxu0 0.0
      %263 = vmatprep.mubr.f32.mxu0 0.0
      %264 = vmatmul.mubr.f32.gmra.mrb[0].mxu0 %v190
      %v265 = vpop.f32.mrb[0].mxu0
      %v266 = vadd.f32 %v186, %v265
      %v267 = vpop.f32.mrb[0].mxu0
      %v268 = vadd.f32 %v186, %v267
      %269 = vdwg.mxu0
      %v270 = vadd.f32 %v266, %v268
      %271 = vadd.xlane.f32.xlu0 %v270
      %v272 = vpop.xlane.xlu0 %271
      %v273 = vrcp.pop 256.0
      %v274 = vmul.f32 %v272, %v273
      %v275 = vsub.f32 %v266, %v274
      %v276 = vsub.f32 %v268, %v274
      %v277 = vmul.f32 %v275, %v275
      %v278 = vmul.f32 %v276, %v276
      %v279 = vadd.f32 %v277, %v278
      %280 = vadd.xlane.f32.xlu0 %v279
      %v281 = vpop.xlane.xlu0 %280
      %v282 = vmul.f32 %v281, %v273
      %v283 = vadd.f32 %v282, 1e-05
      %v284 = vrsqrt.pop %v283
      %v285 = vmul.f32 %v275, %v284
      %v286 = vmul.f32 %v276, %v284
      %v287 = vadd.f32 %v285, %v266
      %v288 = vadd.f32 %v286, %v268
      %v289 = vadd.f32 %v287, %v288
      %290 = vadd.xlane.f32.xlu0 %v289
      %v291 = vpop.xlane.xlu0 %290
      %v292 = vmul.f32 %v291, %v273
      %v293 = vsub.f32 %v287, %v292
      %v294 = vsub.f32 %v288, %v292
      %v295 = vmul.f32 %v293, %v293
      %v296 = vmul.f32 %v294, %v294
      %v297 = vadd.f32 %v295, %v296
      %298 = vadd.xlane.f32.xlu0 %v297
      %v299 = vpop.xlane.xlu0 %298
      %v300 = vmul.f32 %v299, %v273
      %v301 = vadd.f32 %v300, 1e-05
      %v302 = vrsqrt.pop %v301
      %v303 = vmul.f32 %v293, %v302
      %v304 = vmul.f32 %v294, %v302
      %v305 = vmax.f32 %v303, 0.0
      %v306 = vmax.f32 %v304, 0.0
      %307 = vst [vmem:[%s170] sm:$0xff] %v305
      %308 = vst [vmem:[%s170 + $0x8] sm:$0xff] %v306
      %p309 = scmp.lt.s32.totalorder %s14, 1
      %s310 = scalar_select %p309, %s14, 1
      %s311 = smul.addr %s310, 2
      %s312 = smul.addr %s311, 8
      %s313 = scalar_lea.vmem %s3, %s312
      // Predicated region
      $region33: #{series2d_block.1} parent=31 // pred_check
        %p314 = pneg %p100
      $region34: #{series2d_block.1} parent=31 // pred_check_branch
        %316 = sbr.rel (%p314) target = $region36
      $region35: #{series2d_block.1} parent=31 // pred_region
        _
      $region36: #{series2d_block.1} parent=31 // pred_fallthru
        _
    $region32: #{series2d_block.1} parent=5 // pred_fallthru
      _
    %p317 = scmp.le.s32.totalorder 2, %s9
    // Predicated region
    $region37: #{series2d_block.1} parent=5 // pred_check
      %p318 = pneg %p317
    $region38: #{series2d_block.1} parent=5 // pred_check_branch
      %320 = sbr.rel (%p318) target = $region40
    $region39: #{series2d_block.1} parent=5 // pred_region
      %s321 = ssub.s32 %s9, 2
      // Predicated region
      $region41: #{series2d_block.1} parent=39 // pred_check
        %p322 = pneg %p106
      $region42: #{series2d_block.1} parent=39 // pred_check_branch
        %324 = sbr.rel (%p322) target = $region44
      $region43: #{series2d_block.1} parent=39 // pred_region
        %p325 = scmp.lt.s32.totalorder %s15, 1
        %s326 = scalar_select %p325, %s15, 1
        %s327 = smul.addr %s326, 2
        %s328 = smul.addr %s327, 8
        %s329 = scalar_lea.vmem %s3, %s328
      $region44: #{series2d_block.1} parent=39 // pred_fallthru
        _
    $region40: #{series2d_block.1} parent=5 // pred_fallthru
      _
  $region6: #{series2d_block.1} parent=0 // loop_footer
    %s13 = sadd.s32 1, %s9
  $region7: #{series2d_block.1} parent=0 // loop_footer_branch
    %8 = sbr.rel target = $region3
  $region8: #{series2d_block.1} parent=0 // loop_exit
    _

</llo_original>
